<compile_context>
chip_gen: v5e
topology: v5e:2x2
jax: 0.10.0
libtpu: 0.0.40
codegen_flags: <defaults>
</compile_context>

<pallas_src>
import functools

import jax
import jax.numpy as jnp
from jax.experimental import pallas as pl
from jax.experimental.pallas import tpu as pltpu

LANE = 128
NEG_INF = -1e9          # additive mask value for non-edges
MAX_TILE_ROWS = 128     # destination-row tile; sized for v7x's 64 MiB VMEM too


# ------------------------------ fused kernel ------------------------------- #

def gat_kernel(a_dst_ref, a_src_ref, adj_ref, xw_ref, b_ref, o_ref):
    """Per destination-row tile (TR rows):
      a_dst_ref : [H, TR, 1]  f32   alpha_dst for the tile's destination nodes
      a_src_ref : [H, 1,  N]  f32   alpha_src for all source nodes
      adj_ref   : [TR, N]     int8  adjacency (1 = edge src->dst, incl. self)
      xw_ref    : [H, N, D]   bf16  transformed source features, per head
      b_ref     : [1, D]      f32   output bias
      o_ref     : [TR, D]     f32   output tile
    """
    heads = xw_ref.shape[0]

    # attention logits for all heads at once: e[h,i,j] = a_dst[i,h] + a_src[j,h]
    e = a_dst_ref[...] + a_src_ref[...]                       # [H, TR, N] f32
    e = jnp.maximum(e, 0.2 * e)                               # LeakyReLU(0.2)

    adj = adj_ref[...].astype(jnp.float32)                    # [TR, N]
    e = jnp.where(adj[None, :, :] > 0.0, e, NEG_INF)          # drop non-edges

    # per-destination softmax over source nodes (last axis), in f32
    m = jnp.max(e, axis=-1, keepdims=True)
    p = jnp.exp(e - m)
    inv = pl.reciprocal(jnp.sum(p, axis=-1, keepdims=True), approx=True)
    att = (p * inv).astype(xw_ref.dtype)                      # bf16 [H, TR, N]

    # single batched MXU matmul for all heads, f32 accumulation
    agg = jnp.einsum("hrn,hnd->hrd", att, xw_ref[...],
                     preferred_element_type=jnp.float32)      # [H, TR, D]

    out = jnp.sum(agg, axis=0) * (1.0 / heads) + b_ref[...]   # mean over heads
    o_ref[...] = jnp.maximum(out, 0.0)                        # F.relu


# ------------------------------ wrappers ------------------------------------ #

@functools.partial(jax.jit, static_argnames=("heads", "h_feats"))
def gat_pallas(x, adj_i8, w, att_src, att_dst, bias, *, heads, h_feats):
    n, f = x.shape
    f_pad = ((f + LANE - 1) // LANE) * LANE

    # ---- destination-row tiling (static shape math) ----
    n_sub = ((n + 7) // 8) * 8
    tile_r = n_sub if n_sub <= MAX_TILE_ROWS else MAX_TILE_ROWS
    n_pad = ((n_sub + tile_r - 1) // tile_r) * tile_r
    grid = (n_pad // tile_r,)

    # ---- one-time layout / parameter prep (plain XLA, outside the kernel) ----
    x_p = jnp.pad(x, ((0, n_pad - n), (0, f_pad - f)))            # [Np, Fp]
    w_p = jnp.pad(w, ((0, f_pad - f), (0, 0)))                    # [Fp, H*D]
    xw = jnp.dot(x_p, w_p)                                        # [Np, H*D] f32
    xw_h = xw.reshape(n_pad, heads, h_feats).transpose(1, 0, 2)   # [H, Np, D]
    a_dst = jnp.einsum("hnd,hd->hn", xw_h, att_dst)[..., None]    # [H, Np, 1]
    a_src = jnp.einsum("hnd,hd->hn", xw_h, att_src)[:, None, :]   # [H, 1, Np]
    xw_bf = xw_h.astype(jnp.bfloat16)                             # MXU operand
    adj_p = jnp.pad(adj_i8, ((0, n_pad - n), (0, n_pad - n)))     # [Np, Np] i8
    b_row = bias.reshape(1, h_feats).astype(jnp.float32)

    # ---- VMEM budget: double-buffered tiled blocks + resident slabs + temps ----
    tile_bytes = 2 * (heads * tile_r * 4          # a_dst blocks
                      + tile_r * n_pad            # int8 adjacency blocks
                      + tile_r * h_feats * 4)     # output blocks
    resident = (heads * n_pad * h_feats * 2       # bf16 xw slab
                + heads * n_pad * 4 + h_feats * 4)
    temps = 4 * heads * tile_r * n_pad * 4        # e / p / att / agg live values
    vmem_limit = int(min(64 * 2**20,
                         max(16 * 2**20, 2 * (tile_bytes + resident + temps))))

    flops = (heads * n_pad * n_pad * 8                     # logits + softmax VPU
             + 2 * heads * n_pad * n_pad * h_feats)        # aggregation matmul
    bytes_accessed = (2 * 4 * heads * n_pad                # a_dst + a_src
                      + n_pad * n_pad                      # int8 adjacency
                      + 2 * heads * n_pad * h_feats        # bf16 xw
                      + 4 * h_feats
                      + 4 * n_pad * h_feats)               # output

    out = pl.pallas_call(
        gat_kernel,
        out_shape=jax.ShapeDtypeStruct((n_pad, h_feats), jnp.float32),
        grid=grid,
        in_specs=[
            pl.BlockSpec((heads, tile_r, 1), lambda i: (0, i, 0)),       # a_dst
            pl.BlockSpec((heads, 1, n_pad), lambda i: (0, 0, 0)),        # a_src
            pl.BlockSpec((tile_r, n_pad), lambda i: (i, 0)),             # adj
            pl.BlockSpec((heads, n_pad, h_feats), lambda i: (0, 0, 0)),  # xw
            pl.BlockSpec((1, h_feats), lambda i: (0, 0)),                # bias
        ],
        out_specs=pl.BlockSpec((tile_r, h_feats), lambda i: (i, 0)),
        compiler_params=pltpu.CompilerParams(
            dimension_semantics=("parallel",),
            vmem_limit_bytes=vmem_limit),
        cost_estimate=pl.CostEstimate(
            flops=flops,
            transcendentals=heads * n_pad * (n_pad + 1),
            bytes_accessed=bytes_accessed),
    )(a_dst, a_src, adj_p, xw_bf, b_row)
    return out[:n]


def gat_forward(params, x, edge_index, *, heads, h_feats):
    """Matches GAT.forward(x, edge_index): GATConv(concat=False) + ReLU."""
    n = x.shape[0]
    # dense int8 adjacency; messages flow source -> target => adj[tgt, src] = 1
    adj = jnp.zeros((n, n), jnp.int8).at[edge_index[1], edge_index[0]].set(1)
    adj = jnp.maximum(adj, jnp.eye(n, dtype=jnp.int8))   # add_self_loops=True
    return gat_pallas(x, adj, params["w"], params["att_src"],
                      params["att_dst"], params["bias"],
                      heads=heads, h_feats=h_feats)


# pure-JAX f32 reference (numerical sanity check)
def gat_reference(params, x, edge_index, *, heads, h_feats):
    n = x.shape[0]
    adj = jnp.zeros((n, n), jnp.float32).at[edge_index[1], edge_index[0]].set(1.0)
    adj = jnp.maximum(adj, jnp.eye(n, dtype=jnp.float32))
    xw = (x @ params["w"]).reshape(n, heads, h_feats)
    a_src = jnp.einsum("nhd,hd->nh", xw, params["att_src"])
    a_dst = jnp.einsum("nhd,hd->nh", xw, params["att_dst"])
    e = a_dst[:, None, :] + a_src[None, :, :]                 # [i, j, h]
    e = jnp.where(e > 0, e, 0.2 * e)
    e = jnp.where(adj[:, :, None] > 0, e, NEG_INF)
    e = e - e.max(axis=1, keepdims=True)
    p = jnp.exp(e)
    att = p / p.sum(axis=1, keepdims=True)
    out = jnp.einsum("ijh,jhd->ihd", att, xw).mean(axis=1) + params["bias"]
    return jnp.maximum(out, 0.0)


# ------------------------------ main ---------------------------------------- #

if __name__ == "__main__":
    h_feats = 32
    heads = 8
    in_feat = 116            # GATConv(116, h_feats, heads=8, concat=False)
    n_nodes = 16

    key = jax.random.PRNGKey(0)
    k_x, k_w, k_as, k_ad, k_b = jax.random.split(key, 5)

    params = {
        # lin weight stored as [in, heads*h_feats] (already "transposed")
        "w": jax.random.normal(k_w, (in_feat, heads * h_feats), jnp.float32) * 0.1,
        "att_src": jax.random.normal(k_as, (heads, h_feats), jnp.float32) * 0.1,
        "att_dst": jax.random.normal(k_ad, (heads, h_feats), jnp.float32) * 0.1,
        "bias": jax.random.normal(k_b, (h_feats,), jnp.float32) * 0.1,
    }

    # deterministic inputs: node features + undirected ring-with-chords graph
    x = jax.random.normal(k_x, (n_nodes, in_feat), jnp.float32)
    src, dst = [], []
    for i in range(n_nodes):
        for off in (1, 3):
            j = (i + off) % n_nodes
            src += [i, j]
            dst += [j, i]
    edge_index = jnp.array([src, dst], dtype=jnp.int32)       # [2, 64]

    out = gat_forward(params, x, edge_index, heads=heads, h_feats=h_feats)
    out = jax.block_until_ready(out)

    ref = gat_reference(params, x, edge_index, heads=heads, h_feats=h_feats)

    assert out.shape == (n_nodes, h_feats)
    assert bool(jnp.all(jnp.isfinite(out)))
    # bf16 MXU inputs + approx reciprocal => slightly looser tolerance than f32
    assert bool(jnp.allclose(out, ref, rtol=3e-2, atol=3e-2)), \
        float(jnp.max(jnp.abs(out - ref)))
    print("KERNEL_OK")
</pallas_src>

<mosaic_0001>
module attributes {stable_mosaic.version = 11 : i64} {
  func.func @gat_kernel(%arg0: i32, %arg1: memref<8x16x1xf32, #tpu.memory_space<vmem>>, %arg2: memref<8x1x16xf32, #tpu.memory_space<vmem>>, %arg3: memref<16x16xi8, #tpu.memory_space<vmem>>, %arg4: memref<8x16x32xbf16, #tpu.memory_space<vmem>>, %arg5: memref<1x32xf32, #tpu.memory_space<vmem>>, %arg6: memref<16x32xf32, #tpu.memory_space<vmem>>) attributes {dimension_semantics = [#tpu.dimension_semantics<parallel>], iteration_bounds = array<i64: 1>, scalar_prefetch = 0 : i64, scratch_operands = 0 : i64, tpu.core_type = #tpu.core_type<tc>, window_params = [{transform_indices = @transform_0, window_bounds = array<i64: 8, 16, 1>}, {pipeline_mode = #tpu.pipeline_mode<synchronous>, transform_indices = @transform_1, window_bounds = array<i64: 8, 1, 16>}, {transform_indices = @transform_2, window_bounds = array<i64: 16, 16>}, {pipeline_mode = #tpu.pipeline_mode<synchronous>, transform_indices = @transform_3, window_bounds = array<i64: 8, 16, 32>}, {pipeline_mode = #tpu.pipeline_mode<synchronous>, transform_indices = @transform_4, window_bounds = array<i64: 1, 32>}, {transform_indices = @transform_5, window_bounds = array<i64: 16, 32>}]} {
    %c0 = arith.constant 0 : index
    %c0_0 = arith.constant 0 : index
    %c0_1 = arith.constant 0 : index
    %0 = vector.load %arg1[%c0, %c0_0, %c0_1] : memref<8x16x1xf32, #tpu.memory_space<vmem>>, vector<8x16x1xf32>
    %c0_2 = arith.constant 0 : index
    %c0_3 = arith.constant 0 : index
    %c0_4 = arith.constant 0 : index
    %1 = vector.load %arg2[%c0_2, %c0_3, %c0_4] : memref<8x1x16xf32, #tpu.memory_space<vmem>>, vector<8x1x16xf32>
    %2 = vector.broadcast %0 : vector<8x16x1xf32> to vector<8x16x16xf32>
    %3 = vector.broadcast %1 : vector<8x1x16xf32> to vector<8x16x16xf32>
    %4 = arith.addf %2, %3 : vector<8x16x16xf32>
    %cst = arith.constant 2.000000e-01 : f32
    %5 = vector.broadcast %cst : f32 to vector<8x16x16xf32>
    %6 = arith.mulf %5, %4 : vector<8x16x16xf32>
    %7 = arith.maximumf %4, %6 : vector<8x16x16xf32>
    %c0_5 = arith.constant 0 : index
    %c0_6 = arith.constant 0 : index
    %8 = vector.load %arg3[%c0_5, %c0_6] : memref<16x16xi8, #tpu.memory_space<vmem>>, vector<16x16xi8>
    %9 = arith.sitofp %8 : vector<16x16xi8> to vector<16x16xf32>
    %10 = vector.shape_cast %9 : vector<16x16xf32> to vector<1x16x16xf32>
    %cst_7 = arith.constant 0.000000e+00 : f32
    %11 = vector.broadcast %cst_7 : f32 to vector<1x16x16xf32>
    %12 = arith.cmpf ogt, %10, %11 : vector<1x16x16xf32>
    %cst_8 = arith.constant -1.000000e+09 : f32
    %13 = vector.shape_cast %12 : vector<1x16x16xi1> to vector<1x16x16xi1>
    %14 = vector.broadcast %13 : vector<1x16x16xi1> to vector<8x16x16xi1>
    %15 = vector.broadcast %cst_8 : f32 to vector<8x16x16xf32>
    %16 = arith.select %14, %7, %15 : vector<8x16x16xi1>, vector<8x16x16xf32>
    %cst_9 = arith.constant dense<0xFF800000> : vector<8x16xf32>
    %17 = vector.multi_reduction <maximumf>, %16, %cst_9 [2] : vector<8x16x16xf32> to vector<8x16xf32>
    %18 = vector.shape_cast %17 : vector<8x16xf32> to vector<8x16x1xf32>
    %19 = vector.broadcast %18 : vector<8x16x1xf32> to vector<8x16x16xf32>
    %20 = arith.subf %16, %19 : vector<8x16x16xf32>
    %21 = math.exp %20 : vector<8x16x16xf32>
    %cst_10 = arith.constant dense<0.000000e+00> : vector<8x16xf32>
    %22 = vector.multi_reduction <add>, %21, %cst_10 [2] : vector<8x16x16xf32> to vector<8x16xf32>
    %23 = vector.shape_cast %22 : vector<8x16xf32> to vector<8x16x1xf32>
    %24 = tpu.reciprocal %23 {approx = true} : vector<8x16x1xf32> -> vector<8x16x1xf32>
    %25 = vector.broadcast %24 : vector<8x16x1xf32> to vector<8x16x16xf32>
    %26 = arith.mulf %21, %25 : vector<8x16x16xf32>
    %27 = arith.truncf %26 : vector<8x16x16xf32> to vector<8x16x16xbf16>
    %c0_11 = arith.constant 0 : index
    %c0_12 = arith.constant 0 : index
    %c0_13 = arith.constant 0 : index
    %28 = vector.load %arg4[%c0_11, %c0_12, %c0_13] : memref<8x16x32xbf16, #tpu.memory_space<vmem>>, vector<8x16x32xbf16>
    "tpu.trace_start"() <{level = 10 : i32, message = "hrn,hnd->hrd"}> : () -> ()
    %cst_14 = arith.constant dense<0.000000e+00> : vector<8x16x32xf32>
    %29 = tpu.matmul %27, %28, %cst_14 {dimension_numbers = #tpu.dot_dimension_numbers<[2], [1], [1], [2], [0, 0, 0, 1, 1, 2], [0], [0]>} : vector<8x16x16xbf16>, vector<8x16x32xbf16>, vector<8x16x32xf32> -> vector<8x16x32xf32>
    "tpu.trace_stop"() : () -> ()
    %cst_15 = arith.constant dense<0.000000e+00> : vector<16x32xf32>
    %30 = vector.multi_reduction <add>, %29, %cst_15 [0] : vector<8x16x32xf32> to vector<16x32xf32>
    %cst_16 = arith.constant 1.250000e-01 : f32
    %31 = vector.broadcast %cst_16 : f32 to vector<16x32xf32>
    %32 = arith.mulf %30, %31 : vector<16x32xf32>
    %c0_17 = arith.constant 0 : index
    %c0_18 = arith.constant 0 : index
    %33 = vector.load %arg5[%c0_17, %c0_18] : memref<1x32xf32, #tpu.memory_space<vmem>>, vector<1x32xf32>
    %34 = vector.broadcast %33 : vector<1x32xf32> to vector<16x32xf32>
    %35 = arith.addf %32, %34 : vector<16x32xf32>
    %cst_19 = arith.constant 0.000000e+00 : f32
    %36 = vector.broadcast %cst_19 : f32 to vector<16x32xf32>
    %37 = arith.maximumf %35, %36 : vector<16x32xf32>
    %c0_20 = arith.constant 0 : index
    %c0_21 = arith.constant 0 : index
    %38 = vector.load %arg6[%c0_20, %c0_21] : memref<16x32xf32, #tpu.memory_space<vmem>>, vector<16x32xf32>
    tpu.vector_store %arg6[%c0_20, %c0_21], %37 {strides = array<i32>} : memref<16x32xf32, #tpu.memory_space<vmem>>, vector<16x32xf32>,
    return
  }
  func.func @transform_0(%arg0: i32) -> (i32, i32, i32) {
    %c0_i32 = arith.constant 0 : i32
    %c0_i32_0 = arith.constant 0 : i32
    %c0_i32_1 = arith.constant 0 : i32
    return %c0_i32, %arg0, %c0_i32_0 : i32, i32, i32
  }
  func.func @transform_1(%arg0: i32) -> (i32, i32, i32) {
    %c0_i32 = arith.constant 0 : i32
    %c0_i32_0 = arith.constant 0 : i32
    %c0_i32_1 = arith.constant 0 : i32
    %c0_i32_2 = arith.constant 0 : i32
    return %c0_i32, %c0_i32_0, %c0_i32_1 : i32, i32, i32
  }
  func.func @transform_2(%arg0: i32) -> (i32, i32) {
    %c0_i32 = arith.constant 0 : i32
    %c0_i32_0 = arith.constant 0 : i32
    return %arg0, %c0_i32 : i32, i32
  }
  func.func @transform_3(%arg0: i32) -> (i32, i32, i32) {
    %c0_i32 = arith.constant 0 : i32
    %c0_i32_0 = arith.constant 0 : i32
    %c0_i32_1 = arith.constant 0 : i32
    %c0_i32_2 = arith.constant 0 : i32
    return %c0_i32, %c0_i32_0, %c0_i32_1 : i32, i32, i32
  }
  func.func @transform_4(%arg0: i32) -> (i32, i32) {
    %c0_i32 = arith.constant 0 : i32
    %c0_i32_0 = arith.constant 0 : i32
    %c0_i32_1 = arith.constant 0 : i32
    return %c0_i32, %c0_i32_0 : i32, i32
  }
  func.func @transform_5(%arg0: i32) -> (i32, i32) {
    %c0_i32 = arith.constant 0 : i32
    %c0_i32_0 = arith.constant 0 : i32
    return %arg0, %c0_i32 : i32, i32
  }
}

</mosaic_0001>

<llo_original>
// kernel: gat_pallas.1
$region0: #{gat_pallas.1}
  #allocation0 [shape = 'u32[]', space=smem, size = 0x4, offset = 0x4, fixed_abs, tag = 'smem constant byte address 0x4 - core index']
  #allocation1 [shape = 'u32[72,128]{1,0:T(1,128)}', space=vmem, size = 0x9000, scoped, tag = 'internal scratch']
  %s0 = inlined_call_operand.vmem [shape: f32[8,16,1], index: 0, kind: input, shape index: {}]
  %s1 = inlined_call_operand.vmem [shape: f32[8,1,16], index: 1, kind: input, shape index: {}]
  %s2 = inlined_call_operand.vmem [shape: s8[16,16], index: 2, kind: input, shape index: {}]
  %s3 = inlined_call_operand.vmem [shape: bf16[8,16,32], index: 3, kind: input, shape index: {}]
  %s4 = inlined_call_operand.vmem [shape: f32[1,32], index: 4, kind: input, shape index: {}]
  %s5 = inlined_call_operand.hbm [shape: f32[16,32], index: 5, kind: output, shape index: {}]
  %s6 = sld [smem:[#allocation0]]
  $region30: #{gat_pallas.1} parent=0
    _
  %s8 = ssub.s32 1, %s6
  %s9 = scalar_select 0, %s8, %s6
  $region1: #{gat_pallas.1} parent=0
    #allocation2 [shape = 'u8[8192]{0}', space=vmem, size = 0x2000, scoped, tag = 'output window, operand 0, single buffered']
    #allocation3 [shape = 's32[1]{0}', space=sflag, size = 0x4, scoped, tag = 'scoped memory for gat_pallas.1']
    %10 = vsyncpa [#allocation3], 0
    // Predicated region
    $region2: #{gat_pallas.1} parent=1 // pred_check
      _
    $region3: #{gat_pallas.1} parent=1 // pred_check_branch
      %12 = sbr.rel (0) target = $region5
    $region4: #{gat_pallas.1} parent=1 // pred_region
      _
    $region5: #{gat_pallas.1} parent=1 // pred_fallthru
      _
    // Predicated region
    $region6: #{gat_pallas.1} parent=1 // pred_check
      _
    $region7: #{gat_pallas.1} parent=1 // pred_check_branch
      %14 = sbr.rel (0) target = $region9
    $region8: #{gat_pallas.1} parent=1 // pred_region
      _
    $region9: #{gat_pallas.1} parent=1 // pred_fallthru
      _
    // Predicated region
    $region10: #{gat_pallas.1} parent=1 // pred_check
      _
    $region11: #{gat_pallas.1} parent=1 // pred_check_branch
      %16 = sbr.rel (0) target = $region13
    $region12: #{gat_pallas.1} parent=1 // pred_region
      _
    $region13: #{gat_pallas.1} parent=1 // pred_fallthru
      _
    // Predicated region
    $region14: #{gat_pallas.1} parent=1 // pred_check
      _
    $region15: #{gat_pallas.1} parent=1 // pred_check_branch
      %18 = sbr.rel (0) target = $region17
    $region16: #{gat_pallas.1} parent=1 // pred_region
      _
    $region17: #{gat_pallas.1} parent=1 // pred_fallthru
      _
    // Predicated region
    $region18: #{gat_pallas.1} parent=1 // pred_check
      _
    $region19: #{gat_pallas.1} parent=1 // pred_check_branch
      %20 = sbr.rel (0) target = $region21
    $region20: #{gat_pallas.1} parent=1 // pred_region
      _
    $region21: #{gat_pallas.1} parent=1 // pred_fallthru
      _
    %v22 = vld [vmem:[%s0] sm:$0xff]
    %v23 = vld [vmem:[%s0 + $0x8] sm:$0xff]
    %v24 = vld [vmem:[%s0 + $0x10] sm:$0xff]
    %v25 = vld [vmem:[%s0 + $0x18] sm:$0xff]
    %v26 = vld [vmem:[%s0 + $0x20] sm:$0xff]
    %v27 = vld [vmem:[%s0 + $0x28] sm:$0xff]
    %v28 = vld [vmem:[%s0 + $0x30] sm:$0xff]
    %v29 = vld [vmem:[%s0 + $0x38] sm:$0xff]
    %v30 = vld [vmem:[%s0 + $0x40] sm:$0xff]
    %v31 = vld [vmem:[%s0 + $0x48] sm:$0xff]
    %v32 = vld [vmem:[%s0 + $0x50] sm:$0xff]
    %v33 = vld [vmem:[%s0 + $0x58] sm:$0xff]
    %v34 = vld [vmem:[%s0 + $0x60] sm:$0xff]
    %v35 = vld [vmem:[%s0 + $0x68] sm:$0xff]
    %v36 = vld [vmem:[%s0 + $0x70] sm:$0xff]
    %v37 = vld [vmem:[%s0 + $0x78] sm:$0xff]
    %v38 = vld [vmem:[%s1] sm:$0x1]
    %v39 = vld [vmem:[%s1 + $0x1] sm:$0x1]
    %v40 = vld [vmem:[%s1 + $0x2] sm:$0x1]
    %v41 = vld [vmem:[%s1 + $0x3] sm:$0x1]
    %v42 = vld [vmem:[%s1 + $0x4] sm:$0x1]
    %v43 = vld [vmem:[%s1 + $0x5] sm:$0x1]
    %v44 = vld [vmem:[%s1 + $0x6] sm:$0x1]
    %v45 = vld [vmem:[%s1 + $0x7] sm:$0x1]
    %47 = vset.pattern.permute.xlu0 0
    %48 = vperm.xlu0 %47, %v22
    %v49 = vpop.permute.xlu0 %48
    %52 = vset.pattern.permute.xlu0 0
    %53 = vperm.xlu0 %52, %v23
    %v54 = vpop.permute.xlu0 %53
    %57 = vset.pattern.permute.xlu0 0
    %58 = vperm.xlu0 %57, %v24
    %v59 = vpop.permute.xlu0 %58
    %62 = vset.pattern.permute.xlu0 0
    %63 = vperm.xlu0 %62, %v25
    %v64 = vpop.permute.xlu0 %63
    %67 = vset.pattern.permute.xlu0 0
    %68 = vperm.xlu0 %67, %v26
    %v69 = vpop.permute.xlu0 %68
    %72 = vset.pattern.permute.xlu0 0
    %73 = vperm.xlu0 %72, %v27
    %v74 = vpop.permute.xlu0 %73
    %77 = vset.pattern.permute.xlu0 0
    %78 = vperm.xlu0 %77, %v28
    %v79 = vpop.permute.xlu0 %78
    %82 = vset.pattern.permute.xlu0 0
    %83 = vperm.xlu0 %82, %v29
    %v84 = vpop.permute.xlu0 %83
    %87 = vset.pattern.permute.xlu0 0
    %88 = vperm.xlu0 %87, %v30
    %v89 = vpop.permute.xlu0 %88
    %92 = vset.pattern.permute.xlu0 0
    %93 = vperm.xlu0 %92, %v31
    %v94 = vpop.permute.xlu0 %93
    %97 = vset.pattern.permute.xlu0 0
    %98 = vperm.xlu0 %97, %v32
    %v99 = vpop.permute.xlu0 %98
    %102 = vset.pattern.permute.xlu0 0
    %103 = vperm.xlu0 %102, %v33
    %v104 = vpop.permute.xlu0 %103
    %107 = vset.pattern.permute.xlu0 0
    %108 = vperm.xlu0 %107, %v34
    %v109 = vpop.permute.xlu0 %108
    %112 = vset.pattern.permute.xlu0 0
    %113 = vperm.xlu0 %112, %v35
    %v114 = vpop.permute.xlu0 %113
    %117 = vset.pattern.permute.xlu0 0
    %118 = vperm.xlu0 %117, %v36
    %v119 = vpop.permute.xlu0 %118
    %122 = vset.pattern.permute.xlu0 0
    %123 = vperm.xlu0 %122, %v37
    %v124 = vpop.permute.xlu0 %123
    %v134 = vperm.slane %v38, 0
    %v135 = vperm.slane %v39, 0
    %v136 = vperm.slane %v40, 0
    %v137 = vperm.slane %v41, 0
    %v138 = vperm.slane %v42, 0
    %v139 = vperm.slane %v43, 0
    %v140 = vperm.slane %v44, 0
    %v141 = vperm.slane %v45, 0
    %v150 = vadd.f32 %v49, %v134
    %v151 = vadd.f32 %v54, %v134
    %v152 = vadd.f32 %v59, %v135
    %v153 = vadd.f32 %v64, %v135
    %v154 = vadd.f32 %v69, %v136
    %v155 = vadd.f32 %v74, %v136
    %v156 = vadd.f32 %v79, %v137
    %v157 = vadd.f32 %v84, %v137
    %v158 = vadd.f32 %v89, %v138
    %v159 = vadd.f32 %v94, %v138
    %v160 = vadd.f32 %v99, %v139
    %v161 = vadd.f32 %v104, %v139
    %v162 = vadd.f32 %v109, %v140
    %v163 = vadd.f32 %v114, %v140
    %v164 = vadd.f32 %v119, %v141
    %v165 = vadd.f32 %v124, %v141
    %v166 = vmul.f32 %v150, 0.2
    %v167 = vmul.f32 %v151, 0.2
    %v168 = vmul.f32 %v152, 0.2
    %v169 = vmul.f32 %v153, 0.2
    %v170 = vmul.f32 %v154, 0.2
    %v171 = vmul.f32 %v155, 0.2
    %v172 = vmul.f32 %v156, 0.2
    %v173 = vmul.f32 %v157, 0.2
    %v174 = vmul.f32 %v158, 0.2
    %v175 = vmul.f32 %v159, 0.2
    %v176 = vmul.f32 %v160, 0.2
    %v177 = vmul.f32 %v161, 0.2
    %v178 = vmul.f32 %v162, 0.2
    %v179 = vmul.f32 %v163, 0.2
    %v180 = vmul.f32 %v164, 0.2
    %v181 = vmul.f32 %v165, 0.2
    %v182 = vmax.f32 %v150, %v166
    %v183 = vmax.f32 %v151, %v167
    %v184 = vmax.f32 %v152, %v168
    %v185 = vmax.f32 %v153, %v169
    %v186 = vmax.f32 %v154, %v170
    %v187 = vmax.f32 %v155, %v171
    %v188 = vmax.f32 %v156, %v172
    %v189 = vmax.f32 %v157, %v173
    %v190 = vmax.f32 %v158, %v174
    %v191 = vmax.f32 %v159, %v175
    %v192 = vmax.f32 %v160, %v176
    %v193 = vmax.f32 %v161, %v177
    %v194 = vmax.f32 %v162, %v178
    %v195 = vmax.f32 %v163, %v179
    %v196 = vmax.f32 %v164, %v180
    %v197 = vmax.f32 %v165, %v181
    %v198 = vld [vmem:[%s2] sm:$0x3]
    %v199 = vld [vmem:[%s2 + $0x2] sm:$0x3]
    %v200 = vunpack.c.0.s8 %v198
    %v201 = vunpack.c.0.s8 %v199
    %v202 = vcvt.s32.f32 %v200
    %v203 = vcvt.s32.f32 %v201
    %vm204 = vcmp.gt.f32.partialorder %v202, 0.0
    %vm205 = vcmp.gt.f32.partialorder %v203, 0.0
    %v206 = vsel %vm204, 1, 0
    %v207 = vsel %vm205, 1, 0
    %vm208 = vcmp.eq.s32.totalorder %v206, 1
    %vm209 = vcmp.eq.s32.totalorder %v207, 1
    %v210 = vsel %vm208, %v182, -1e+09
    %v211 = vsel %vm209, %v183, -1e+09
    %v212 = vsel %vm208, %v184, -1e+09
    %v213 = vsel %vm209, %v185, -1e+09
    %v214 = vsel %vm208, %v186, -1e+09
    %v215 = vsel %vm209, %v187, -1e+09
    %v216 = vsel %vm208, %v188, -1e+09
    %v217 = vsel %vm209, %v189, -1e+09
    %v218 = vsel %vm208, %v190, -1e+09
    %v219 = vsel %vm209, %v191, -1e+09
    %v220 = vsel %vm208, %v192, -1e+09
    %v221 = vsel %vm209, %v193, -1e+09
    %v222 = vsel %vm208, %v194, -1e+09
    %v223 = vsel %vm209, %v195, -1e+09
    %v224 = vsel %vm208, %v196, -1e+09
    %v225 = vsel %vm209, %v197, -1e+09
    %vm226 = vcmask 130048
    %v227 = vsel %vm226, %v210, -inf
    %228 = vmax.xlane.f32.xlu0 %v227
    %v229 = vpop.xlane.xlu0 %228
    %v230 = vsel %vm226, %v211, -inf
    %231 = vmax.xlane.f32.xlu0 %v230
    %v232 = vpop.xlane.xlu0 %231
    %v233 = vsel %vm226, %v212, -inf
    %234 = vmax.xlane.f32.xlu0 %v233
    %v235 = vpop.xlane.xlu0 %234
    %v236 = vsel %vm226, %v213, -inf
    %237 = vmax.xlane.f32.xlu0 %v236
    %v238 = vpop.xlane.xlu0 %237
    %v239 = vsel %vm226, %v214, -inf
    %240 = vmax.xlane.f32.xlu0 %v239
    %v241 = vpop.xlane.xlu0 %240
    %v242 = vsel %vm226, %v215, -inf
    %243 = vmax.xlane.f32.xlu0 %v242
    %v244 = vpop.xlane.xlu0 %243
    %v245 = vsel %vm226, %v216, -inf
    %246 = vmax.xlane.f32.xlu0 %v245
    %v247 = vpop.xlane.xlu0 %246
    %v248 = vsel %vm226, %v217, -inf
    %249 = vmax.xlane.f32.xlu0 %v248
    %v250 = vpop.xlane.xlu0 %249
    %v251 = vsel %vm226, %v218, -inf
    %252 = vmax.xlane.f32.xlu0 %v251
    %v253 = vpop.xlane.xlu0 %252
    %v254 = vsel %vm226, %v219, -inf
    %255 = vmax.xlane.f32.xlu0 %v254
    %v256 = vpop.xlane.xlu0 %255
    %v257 = vsel %vm226, %v220, -inf
    %258 = vmax.xlane.f32.xlu0 %v257
    %v259 = vpop.xlane.xlu0 %258
    %v260 = vsel %vm226, %v221, -inf
    %261 = vmax.xlane.f32.xlu0 %v260
    %v262 = vpop.xlane.xlu0 %261
    %v263 = vsel %vm226, %v222, -inf
    %264 = vmax.xlane.f32.xlu0 %v263
    %v265 = vpop.xlane.xlu0 %264
    %v266 = vsel %vm226, %v223, -inf
    %267 = vmax.xlane.f32.xlu0 %v266
    %v268 = vpop.xlane.xlu0 %267
    %v269 = vsel %vm226, %v224, -inf
    %270 = vmax.xlane.f32.xlu0 %v269
    %v271 = vpop.xlane.xlu0 %270
    %v272 = vsel %vm226, %v225, -inf
    %273 = vmax.xlane.f32.xlu0 %v272
    %v274 = vpop.xlane.xlu0 %273
    %v275 = vsub.f32 %v210, %v229
    %v276 = vsub.f32 %v211, %v232
    %v277 = vsub.f32 %v212, %v235
    %v278 = vsub.f32 %v213, %v238
    %v279 = vsub.f32 %v214, %v241
    %v280 = vsub.f32 %v215, %v244
    %v281 = vsub.f32 %v216, %v247
    %v282 = vsub.f32 %v217, %v250
    %v283 = vsub.f32 %v218, %v253
    %v284 = vsub.f32 %v219, %v256
    %v285 = vsub.f32 %v220, %v259
    %v286 = vsub.f32 %v221, %v262
    %v287 = vsub.f32 %v222, %v265
    %v288 = vsub.f32 %v223, %v268
    %v289 = vsub.f32 %v224, %v271
    %v290 = vsub.f32 %v225, %v274
    %v291 = vmul.f32 %v275, 1.442695
    %v292 = vpow.pop %v291
    %v293 = vmul.f32 %v276, 1.442695
    %v294 = vpow.pop %v293
    %v295 = vmul.f32 %v277, 1.442695
    %v296 = vpow.pop %v295
    %v297 = vmul.f32 %v278, 1.442695
    %v298 = vpow.pop %v297
    %v299 = vmul.f32 %v279, 1.442695
    %v300 = vpow.pop %v299
    %v301 = vmul.f32 %v280, 1.442695
    %v302 = vpow.pop %v301
    %v303 = vmul.f32 %v281, 1.442695
    %v304 = vpow.pop %v303
    %v305 = vmul.f32 %v282, 1.442695
    %v306 = vpow.pop %v305
    %v307 = vmul.f32 %v283, 1.442695
    %v308 = vpow.pop %v307
    %v309 = vmul.f32 %v284, 1.442695
    %v310 = vpow.pop %v309
    %v311 = vmul.f32 %v285, 1.442695
    %v312 = vpow.pop %v311
    %v313 = vmul.f32 %v286, 1.442695
    %v314 = vpow.pop %v313
    %v315 = vmul.f32 %v287, 1.442695
    %v316 = vpow.pop %v315
    %v317 = vmul.f32 %v288, 1.442695
    %v318 = vpow.pop %v317
    %v319 = vmul.f32 %v289, 1.442695
    %v320 = vpow.pop %v319
    %v321 = vmul.f32 %v290, 1.442695
    %v322 = vpow.pop %v321
    %v323 = vsel %vm226, %v292, 0.0
    %324 = vadd.xlane.f32.xlu0 %v323
    %v325 = vpop.xlane.xlu0 %324
    %v326 = vsel %vm226, %v294, 0.0
    %327 = vadd.xlane.f32.xlu0 %v326
    %v328 = vpop.xlane.xlu0 %327
    %v329 = vsel %vm226, %v296, 0.0
    %330 = vadd.xlane.f32.xlu0 %v329
    %v331 = vpop.xlane.xlu0 %330
    %v332 = vsel %vm226, %v298, 0.0
    %333 = vadd.xlane.f32.xlu0 %v332
    %v334 = vpop.xlane.xlu0 %333
    %v335 = vsel %vm226, %v300, 0.0
    %336 = vadd.xlane.f32.xlu0 %v335
    %v337 = vpop.xlane.xlu0 %336
    %v338 = vsel %vm226, %v302, 0.0
    %339 = vadd.xlane.f32.xlu0 %v338
    %v340 = vpop.xlane.xlu0 %339
    %v341 = vsel %vm226, %v304, 0.0
    %342 = vadd.xlane.f32.xlu0 %v341
    %v343 = vpop.xlane.xlu0 %342
    %v344 = vsel %vm226, %v306, 0.0
    %345 = vadd.xlane.f32.xlu0 %v344
    %v346 = vpop.xlane.xlu0 %345
    %v347 = vsel %vm226, %v308, 0.0
    %348 = vadd.xlane.f32.xlu0 %v347
    %v349 = vpop.xlane.xlu0 %348
    %v350 = vsel %vm226, %v310, 0.0
    %351 = vadd.xlane.f32.xlu0 %v350
    %v352 = vpop.xlane.xlu0 %351
    %v353 = vsel %vm226, %v312, 0.0
    %354 = vadd.xlane.f32.xlu0 %v353
    %v355 = vpop.xlane.xlu0 %354
    %v356 = vsel %vm226, %v314, 0.0
    %357 = vadd.xlane.f32.xlu0 %v356
    %v358 = vpop.xlane.xlu0 %357
    %v359 = vsel %vm226, %v316, 0.0
    %360 = vadd.xlane.f32.xlu0 %v359
    %v361 = vpop.xlane.xlu0 %360
    %v362 = vsel %vm226, %v318, 0.0
    %363 = vadd.xlane.f32.xlu0 %v362
    %v364 = vpop.xlane.xlu0 %363
    %v365 = vsel %vm226, %v320, 0.0
    %366 = vadd.xlane.f32.xlu0 %v365
    %v367 = vpop.xlane.xlu0 %366
    %v368 = vsel %vm226, %v322, 0.0
    %369 = vadd.xlane.f32.xlu0 %v368
    %v370 = vpop.xlane.xlu0 %369
    %v371 = vrcp.pop %v325
    %v372 = vrcp.pop %v328
    %v373 = vrcp.pop %v331
    %v374 = vrcp.pop %v334
    %v375 = vrcp.pop %v337
    %v376 = vrcp.pop %v340
    %v377 = vrcp.pop %v343
    %v378 = vrcp.pop %v346
    %v379 = vrcp.pop %v349
    %v380 = vrcp.pop %v352
    %v381 = vrcp.pop %v355
    %v382 = vrcp.pop %v358
    %v383 = vrcp.pop %v361
    %v384 = vrcp.pop %v364
    %v385 = vrcp.pop %v367
    %v386 = vrcp.pop %v370
    %v387 = vmul.f32 %v292, %v371
    %v388 = vmul.f32 %v294, %v372
    %v389 = vmul.f32 %v296, %v373
    %v390 = vmul.f32 %v298, %v374
    %v391 = vmul.f32 %v300, %v375
    %v392 = vmul.f32 %v302, %v376
    %v393 = vmul.f32 %v304, %v377
    %v394 = vmul.f32 %v306, %v378
    %v395 = vmul.f32 %v308, %v379
    %v396 = vmul.f32 %v310, %v380
    %v397 = vmul.f32 %v312, %v381
    %v398 = vmul.f32 %v314, %v382
    %v399 = vmul.f32 %v316, %v383
    %v400 = vmul.f32 %v318, %v384
    %v401 = vmul.f32 %v320, %v385
    %v402 = vmul.f32 %v322, %v386
    %v403 = vpack.c.bf16 %v387, %v387
    %v404 = vpack.c.bf16 %v388, %v388
    %v405 = vpack.c.bf16 %v389, %v389
    %v406 = vpack.c.bf16 %v390, %v390
    %v407 = vpack.c.bf16 %v391, %v391
    %v408 = vpack.c.bf16 %v392, %v392
    %v409 = vpack.c.bf16 %v393, %v393
    %v410 = vpack.c.bf16 %v394, %v394
    %v411 = vpack.c.bf16 %v395, %v395
    %v412 = vpack.c.bf16 %v396, %v396
    %v413 = vpack.c.bf16 %v397, %v397
    %v414 = vpack.c.bf16 %v398, %v398
    %v415 = vpack.c.bf16 %v399, %v399
    %v416 = vpack.c.bf16 %v400, %v400
    %v417 = vpack.c.bf16 %v401, %v401
    %v418 = vpack.c.bf16 %v402, %v402
    %v419 = vld [vmem:[%s3] sm:$0xf]
    %v420 = vld [vmem:[%s3 + $0x4] sm:$0xf]
    %v421 = vld [vmem:[%s3 + $0x8] sm:$0xf]
    %v422 = vld [vmem:[%s3 + $0xc] sm:$0xf]
    %v423 = vld [vmem:[%s3 + $0x10] sm:$0xf]
    %v424 = vld [vmem:[%s3 + $0x14] sm:$0xf]
    %v425 = vld [vmem:[%s3 + $0x18] sm:$0xf]
    %v426 = vld [vmem:[%s3 + $0x1c] sm:$0xf]
    %v427 = vld [vmem:[%s3 + $0x20] sm:$0xf]
    %v428 = vld [vmem:[%s3 + $0x24] sm:$0xf]
    %v429 = vld [vmem:[%s3 + $0x28] sm:$0xf]
    %v430 = vld [vmem:[%s3 + $0x2c] sm:$0xf]
    %v431 = vld [vmem:[%s3 + $0x30] sm:$0xf]
    %v432 = vld [vmem:[%s3 + $0x34] sm:$0xf]
    %v433 = vld [vmem:[%s3 + $0x38] sm:$0xf]
    %v434 = vld [vmem:[%s3 + $0x3c] sm:$0xf]
    %v437 = vunpack.c.l.b16 %v403
    %v438 = vunpack.c.l.b16 %v404
    %v439 = vpack.c.b16 %v438, %v437
    %v442 = vunpack.c.l.b16 %v419
    %v443 = vunpack.c.l.b16 %v420
    %v444 = vpack.c.b16 %v443, %v442
    %v447 = vsel %vm226, %v439, 0
    %449 = vmatpush.bf16.msra.mxu0 0
    %450 = vmatpush.bf16.msra.mxu0 0
    %451 = vmatpush.bf16.msra.mxu0 0
    %452 = vmatpush.bf16.msra.mxu0 0
    %453 = vmatpush.bf16.msra.mxu0 0
    %454 = vmatpush.bf16.msra.mxu0 0
    %455 = vmatpush.bf16.msra.mxu0 0
    %456 = vmatpush.bf16.msra.mxu0 %v444
    %457 = vmatmul.bf16.gmra.mxu0 %v447
    %v458 = vpop.f32.mrf.mxu0
    %v459 = vadd.f32 0.0, %v458
    %v460 = vpop.f32.mrf.mxu0
    %v461 = vadd.f32 0.0, %v460
    %462 = vdwg.mxu0
    %v465 = vunpack.c.l.b16 %v405
    %v466 = vunpack.c.l.b16 %v406
    %v467 = vpack.c.b16 %v466, %v465
    %v470 = vunpack.c.l.b16 %v421
    %v471 = vunpack.c.l.b16 %v422
    %v472 = vpack.c.b16 %v471, %v470
    %v475 = vsel %vm226, %v467, 0
    %477 = vmatpush.bf16.msra.mxu0 0
    %478 = vmatpush.bf16.msra.mxu0 0
    %479 = vmatpush.bf16.msra.mxu0 0
    %480 = vmatpush.bf16.msra.mxu0 0
    %481 = vmatpush.bf16.msra.mxu0 0
    %482 = vmatpush.bf16.msra.mxu0 0
    %483 = vmatpush.bf16.msra.mxu0 0
    %484 = vmatpush.bf16.msra.mxu0 %v472
    %485 = vmatmul.bf16.gmra.mxu0 %v475
    %v486 = vpop.f32.mrf.mxu0
    %v487 = vadd.f32 0.0, %v486
    %v488 = vpop.f32.mrf.mxu0
    %v489 = vadd.f32 0.0, %v488
    %490 = vdwg.mxu0
    %v493 = vunpack.c.l.b16 %v407
    %v494 = vunpack.c.l.b16 %v408
    %v495 = vpack.c.b16 %v494, %v493
    %v498 = vunpack.c.l.b16 %v423
    %v499 = vunpack.c.l.b16 %v424
    %v500 = vpack.c.b16 %v499, %v498
    %v503 = vsel %vm226, %v495, 0
    %505 = vmatpush.bf16.msra.mxu0 0
    %506 = vmatpush.bf16.msra.mxu0 0
    %507 = vmatpush.bf16.msra.mxu0 0
    %508 = vmatpush.bf16.msra.mxu0 0
    %509 = vmatpush.bf16.msra.mxu0 0
    %510 = vmatpush.bf16.msra.mxu0 0
    %511 = vmatpush.bf16.msra.mxu0 0
    %512 = vmatpush.bf16.msra.mxu0 %v500
    %513 = vmatmul.bf16.gmra.mxu0 %v503
    %v514 = vpop.f32.mrf.mxu0
    %v515 = vadd.f32 0.0, %v514
    %v516 = vpop.f32.mrf.mxu0
    %v517 = vadd.f32 0.0, %v516
    %518 = vdwg.mxu0
    %v521 = vunpack.c.l.b16 %v409
    %v522 = vunpack.c.l.b16 %v410
    %v523 = vpack.c.b16 %v522, %v521
    %v526 = vunpack.c.l.b16 %v425
    %v527 = vunpack.c.l.b16 %v426
    %v528 = vpack.c.b16 %v527, %v526
    %v531 = vsel %vm226, %v523, 0
    %533 = vmatpush.bf16.msra.mxu0 0
    %534 = vmatpush.bf16.msra.mxu0 0
    %535 = vmatpush.bf16.msra.mxu0 0
    %536 = vmatpush.bf16.msra.mxu0 0
    %537 = vmatpush.bf16.msra.mxu0 0
    %538 = vmatpush.bf16.msra.mxu0 0
    %539 = vmatpush.bf16.msra.mxu0 0
    %540 = vmatpush.bf16.msra.mxu0 %v528
    %541 = vmatmul.bf16.gmra.mxu0 %v531
    %v542 = vpop.f32.mrf.mxu0
    %v543 = vadd.f32 0.0, %v542
    %v544 = vpop.f32.mrf.mxu0
    %v545 = vadd.f32 0.0, %v544
    %546 = vdwg.mxu0
    %v549 = vunpack.c.l.b16 %v411
    %v550 = vunpack.c.l.b16 %v412
    %v551 = vpack.c.b16 %v550, %v549
    %v554 = vunpack.c.l.b16 %v427
    %v555 = vunpack.c.l.b16 %v428
    %v556 = vpack.c.b16 %v555, %v554
    %v559 = vsel %vm226, %v551, 0
    %561 = vmatpush.bf16.msra.mxu0 0
    %562 = vmatpush.bf16.msra.mxu0 0
    %563 = vmatpush.bf16.msra.mxu0 0
    %564 = vmatpush.bf16.msra.mxu0 0
    %565 = vmatpush.bf16.msra.mxu0 0
    %566 = vmatpush.bf16.msra.mxu0 0
    %567 = vmatpush.bf16.msra.mxu0 0
    %568 = vmatpush.bf16.msra.mxu0 %v556
    %569 = vmatmul.bf16.gmra.mxu0 %v559
    %v570 = vpop.f32.mrf.mxu0
    %v571 = vadd.f32 0.0, %v570
    %v572 = vpop.f32.mrf.mxu0
    %v573 = vadd.f32 0.0, %v572
    %574 = vdwg.mxu0
    %v577 = vunpack.c.l.b16 %v413
    %v578 = vunpack.c.l.b16 %v414
    %v579 = vpack.c.b16 %v578, %v577
    %v582 = vunpack.c.l.b16 %v429
    %v583 = vunpack.c.l.b16 %v430
    %v584 = vpack.c.b16 %v583, %v582
    %v587 = vsel %vm226, %v579, 0
    %589 = vmatpush.bf16.msra.mxu0 0
    %590 = vmatpush.bf16.msra.mxu0 0
    %591 = vmatpush.bf16.msra.mxu0 0
    %592 = vmatpush.bf16.msra.mxu0 0
    %593 = vmatpush.bf16.msra.mxu0 0
    %594 = vmatpush.bf16.msra.mxu0 0
    %595 = vmatpush.bf16.msra.mxu0 0
    %596 = vmatpush.bf16.msra.mxu0 %v584
    %597 = vmatmul.bf16.gmra.mxu0 %v587
    %v598 = vpop.f32.mrf.mxu0
    %v599 = vadd.f32 0.0, %v598
    %v600 = vpop.f32.mrf.mxu0
    %v601 = vadd.f32 0.0, %v600
    %602 = vdwg.mxu0
    %v605 = vunpack.c.l.b16 %v415
    %v606 = vunpack.c.l.b16 %v416
    %v607 = vpack.c.b16 %v606, %v605
    %v610 = vunpack.c.l.b16 %v431
    %v611 = vunpack.c.l.b16 %v432
    %v612 = vpack.c.b16 %v611, %v610
    %v615 = vsel %vm226, %v607, 0
    %617 = vmatpush.bf16.msra.mxu0 0
    %618 = vmatpush.bf16.msra.mxu0 0
    %619 = vmatpush.bf16.msra.mxu0 0
    %620 = vmatpush.bf16.msra.mxu0 0
    %621 = vmatpush.bf16.msra.mxu0 0
    %622 = vmatpush.bf16.msra.mxu0 0
    %623 = vmatpush.bf16.msra.mxu0 0
    %624 = vmatpush.bf16.msra.mxu0 %v612
    %625 = vmatmul.bf16.gmra.mxu0 %v615
    %v626 = vpop.f32.mrf.mxu0
    %v627 = vadd.f32 0.0, %v626
    %v628 = vpop.f32.mrf.mxu0
    %v629 = vadd.f32 0.0, %v628
    %630 = vdwg.mxu0
    %v633 = vunpack.c.l.b16 %v417
    %v634 = vunpack.c.l.b16 %v418
    %v635 = vpack.c.b16 %v634, %v633
    %v638 = vunpack.c.l.b16 %v433
    %v639 = vunpack.c.l.b16 %v434
    %v640 = vpack.c.b16 %v639, %v638
    %v643 = vsel %vm226, %v635, 0
    %645 = vmatpush.bf16.msra.mxu0 0
    %646 = vmatpush.bf16.msra.mxu0 0
    %647 = vmatpush.bf16.msra.mxu0 0
    %648 = vmatpush.bf16.msra.mxu0 0
    %649 = vmatpush.bf16.msra.mxu0 0
    %650 = vmatpush.bf16.msra.mxu0 0
    %651 = vmatpush.bf16.msra.mxu0 0
    %652 = vmatpush.bf16.msra.mxu0 %v640
    %653 = vmatmul.bf16.gmra.mxu0 %v643
    %v654 = vpop.f32.mrf.mxu0
    %v655 = vadd.f32 0.0, %v654
    %v656 = vpop.f32.mrf.mxu0
    %v657 = vadd.f32 0.0, %v656
    %658 = vdwg.mxu0
    %vm659 = vcmask 261120
    %v660 = vsel %vm659, %v459, 0.0
    %v661 = vsel %vm659, %v487, 0.0
    %v662 = vadd.f32 %v660, %v661
    %v663 = vsel %vm659, %v515, 0.0
    %v664 = vadd.f32 %v662, %v663
    %v665 = vsel %vm659, %v543, 0.0
    %v666 = vadd.f32 %v664, %v665
    %v667 = vsel %vm659, %v571, 0.0
    %v668 = vadd.f32 %v666, %v667
    %v669 = vsel %vm659, %v599, 0.0
    %v670 = vadd.f32 %v668, %v669
    %v671 = vsel %vm659, %v627, 0.0
    %v672 = vadd.f32 %v670, %v671
    %v673 = vsel %vm659, %v655, 0.0
    %v674 = vadd.f32 %v672, %v673
    %v675 = vsel %vm659, %v461, 0.0
    %v676 = vsel %vm659, %v489, 0.0
    %v677 = vadd.f32 %v675, %v676
    %v678 = vsel %vm659, %v517, 0.0
    %v679 = vadd.f32 %v677, %v678
    %v680 = vsel %vm659, %v545, 0.0
    %v681 = vadd.f32 %v679, %v680
    %v682 = vsel %vm659, %v573, 0.0
    %v683 = vadd.f32 %v681, %v682
    %v684 = vsel %vm659, %v601, 0.0
    %v685 = vadd.f32 %v683, %v684
    %v686 = vsel %vm659, %v629, 0.0
    %v687 = vadd.f32 %v685, %v686
    %v688 = vsel %vm659, %v657, 0.0
    %v689 = vadd.f32 %v687, %v688
    %v690 = vmul.f32 %v674, 0.125
    %v691 = vmul.f32 %v689, 0.125
    %v692 = vld [vmem:[%s4] sm:$0x1]
    %v694 = vperm.slane %v692, 0
    %v696 = vadd.f32 %v690, %v694
    %v697 = vadd.f32 %v691, %v694
    %v698 = vmax.f32 %v696, 0.0
    %v699 = vmax.f32 %v697, 0.0
    %700 = vst.msk [vmem:[#allocation2] sm:$0xff] %vm659, %v698
    %701 = vst.msk [vmem:[#allocation2 + $0x8] sm:$0xff] %vm659, %v699
    // Predicated region
    $region22: #{gat_pallas.1} parent=1 // pred_check
      _
    $region23: #{gat_pallas.1} parent=1 // pred_check_branch
      %703 = sbr.rel (0) target = $region25
    $region24: #{gat_pallas.1} parent=1 // pred_region
      %705 = vsyncadd [#allocation3], 0
      %s706 = sshll.u32 [#allocation2], 4
      %s707 = int_to_ptr.vmem [resolvable:$true] %s706
      %s708 = sshll.u32 %s5, 4
      %s709 = int_to_ptr.hbm [resolvable:$true] %s708
      %714 = dma.vmem_to_hbm [thread:$0]  %s707, 256, %s709, [#allocation3], 128, 128, 8
    $region25: #{gat_pallas.1} parent=1 // pred_fallthru
      _
    // Predicated region
    $region26: #{gat_pallas.1} parent=1 // pred_check
      _
    $region27: #{gat_pallas.1} parent=1 // pred_check_branch
      %716 = sbr.rel (0) target = $region29
    $region28: #{gat_pallas.1} parent=1 // pred_region
      %718 = dma.done [#allocation3], 256
    $region29: #{gat_pallas.1} parent=1 // pred_fallthru
      _
    %719 = vsyncpa [#allocation3], 1

</llo_original>
